<compile_context>
chip_gen: v7x
topology: tpu7x:2x2x1
jax: 0.10.0
libtpu: 0.0.40
codegen_flags: <defaults>
</compile_context>

<pallas_src>
import functools

import jax
import jax.numpy as jnp
from jax.experimental import pallas as pl
from jax.experimental.pallas import tpu as pltpu


def _round_up(x, m):
    return (x + m - 1) // m * m


def _attention_kernel(hidden_ref, enc_ref, wh_t_ref, we_t_ref, bias_ref, v_ref,
                      out_ref, scores_ref, hh_ref, *, src_len):
    s = pl.program_id(1)
    TS, TB, H = enc_ref.shape
    num_s = scores_ref.shape[0]
    s_pad = num_s * TS

    # hidden @ W_h^T + b is independent of the source position: compute it once per
    # batch tile and keep it resident in VMEM scratch across all src tiles.
    @pl.when(s == 0)
    def _():
        hh_ref[...] = (
            jnp.dot(hidden_ref[...], wh_t_ref[...],
                    preferred_element_type=jnp.float32)
            + bias_ref[...])                                        # (TB, H) f32

    # Encoder tile @ W_e^T on the MXU (bf16 operands, f32 accumulation).
    enc = enc_ref[...]                                              # (TS, TB, H) bf16
    ee = jnp.dot(enc.reshape(TS * TB, H), we_t_ref[...],
                 preferred_element_type=jnp.float32).reshape(TS, TB, H)

    energy = jnp.tanh(hh_ref[...][None, :, :] + ee)                 # (TS, TB, H) f32

    # v-projection: (TS, TB, H) . (H,) -> (TS, TB); staged per src tile in scratch.
    v = v_ref[...].reshape(1, 1, H)
    scores_ref[s] = jnp.sum(energy * v, axis=-1)                    # (TS, TB)

    # Last src tile: assemble the full score row, mask ragged padding, softmax.
    @pl.when(s == num_s - 1)
    def _():
        sc = scores_ref[...].reshape(s_pad, TB).T                   # (TB, S_pad) f32
        if s_pad > src_len:   # static: mask garbage columns from the ragged last tile
            col = jax.lax.broadcasted_iota(jnp.int32, sc.shape, 1)
            sc = jnp.where(col < src_len, sc, -jnp.inf)
        m = jnp.max(sc, axis=-1, keepdims=True)
        e = jnp.exp(sc - m)
        out_ref[...] = e / jnp.sum(e, axis=-1, keepdims=True)


def bahdanau_attention(hidden, encoder_outputs, w_attn, b_attn, w_v,
                       *, tb=None, ts=None):
    """hidden: (B, H); encoder_outputs: (S, B, H) (PyTorch seq-first layout);
    w_attn: (H, 2H); b_attn: (H,); w_v: (1, H).  Returns (B, S) attention weights.

    If given, `tb` must be a multiple of 8 (or the full padded batch) and `ts`
    a multiple of 8 (or >= S)."""
    S, B, H = encoder_outputs.shape

    # ---- batch padding only when needed (keeps in-kernel reshapes layout-preserving)
    B_pad = _round_up(B, 8)
    if B_pad != B:
        hidden = jnp.pad(hidden, ((0, B_pad - B), (0, 0)))
        encoder_outputs = jnp.pad(encoder_outputs, ((0, 0), (0, B_pad - B), (0, 0)))

    # ---- tile selection --------------------------------------------------------
    if tb is None:
        tb = 8
    if ts is None:   # keep one (ts, tb, H) f32 intermediate around ~4 MiB (fits v7x VMEM)
        budget_elems = (4 * 1024 * 1024) // 4
        cap = budget_elems // max(1, tb * H)
        ts = S if cap >= S else max(8, (cap // 8) * 8)
    num_b = pl.cdiv(B_pad, tb)
    num_s = pl.cdiv(S, ts)
    s_pad = num_s * ts

    # ---- operands: bf16 for the MXU streams, f32 for the elementwise path -------
    hidden_in = hidden.astype(jnp.bfloat16)
    enc_in = encoder_outputs.astype(jnp.bfloat16)        # native (S, B, H), no transpose
    wh_t = jnp.asarray(w_attn[:, :H].T, jnp.bfloat16)    # acts on `hidden`
    we_t = jnp.asarray(w_attn[:, H:].T, jnp.bfloat16)    # acts on encoder outputs
    bias = jnp.asarray(b_attn.reshape(1, H), jnp.float32)
    v = jnp.asarray(w_v.reshape(1, H), jnp.float32)

    # ---- compiler params: raise scoped VMEM only when the chosen tiles need it --
    est_bytes = (2 * ts * tb * H * 2                      # double-buffered enc tile (bf16)
                 + 4 * ts * tb * H * 4                    # f32 intermediates (ee / energy)
                 + 4 * H * H * 2                          # weight buffers
                 + 2 * tb * s_pad * 4                     # output block buffers
                 + num_s * _round_up(ts, 8) * _round_up(tb, 128) * 4   # score scratch
                 + tb * _round_up(H, 128) * 4             # hh scratch
                 + (2 << 20))                             # headroom
    cp_kwargs = dict(dimension_semantics=("parallel", "arbitrary"))
    if est_bytes > 12 * 1024 * 1024:
        cp_kwargs["vmem_limit_bytes"] = int(min(est_bytes * 3 // 2, 56 * 1024 * 1024))

    kernel = functools.partial(_attention_kernel, src_len=S)

    out = pl.pallas_call(
        kernel,
        out_shape=jax.ShapeDtypeStruct((B_pad, s_pad), jnp.float32),
        grid_spec=pltpu.PrefetchScalarGridSpec(
            num_scalar_prefetch=0,
            grid=(num_b, num_s),
            in_specs=[
                pl.BlockSpec((tb, H), lambda b, s: (b, 0)),         # hidden
                pl.BlockSpec((ts, tb, H), lambda b, s: (s, b, 0)),  # encoder outputs (S-major)
                pl.BlockSpec((H, H), lambda b, s: (0, 0)),          # W_h^T (resident)
                pl.BlockSpec((H, H), lambda b, s: (0, 0)),          # W_e^T (resident)
                pl.BlockSpec((1, H), lambda b, s: (0, 0)),          # bias
                pl.BlockSpec((1, H), lambda b, s: (0, 0)),          # v
            ],
            out_specs=pl.BlockSpec((tb, s_pad), lambda b, s: (b, 0)),
            scratch_shapes=[
                pltpu.VMEM((num_s, ts, tb), jnp.float32),   # staged per-tile scores
                pltpu.VMEM((tb, H), jnp.float32),           # hoisted hidden @ W_h^T + b
            ],
        ),
        compiler_params=pltpu.CompilerParams(**cp_kwargs),
    )(hidden_in, enc_in, wh_t, we_t, bias, v)

    if B_pad != B or s_pad != S:
        out = out[:B, :S]
    return out


def _reference(hidden, encoder_outputs, w_attn, b_attn, w_v):
    S, B, H = encoder_outputs.shape
    h_rep = jnp.repeat(hidden[:, None, :], S, axis=1)              # (B, S, H)
    enc = jnp.transpose(encoder_outputs, (1, 0, 2))                # (B, S, H)
    cat = jnp.concatenate([h_rep, enc], axis=-1)                   # (B, S, 2H)
    energy = jnp.tanh(jnp.einsum('bsk,hk->bsh', cat, w_attn) + b_attn)
    attn = jnp.einsum('bsh,oh->bso', energy, w_v)[..., 0]          # (B, S)
    return jax.nn.softmax(attn, axis=1)


def _make_inputs(key, B, S, H):
    k1, k2, k3, k4, k5 = jax.random.split(key, 5)
    bound_attn = 1.0 / jnp.sqrt(2.0 * H)
    w_attn = jax.random.uniform(k1, (H, 2 * H), jnp.float32, -bound_attn, bound_attn)
    b_attn = jax.random.uniform(k2, (H,), jnp.float32, -bound_attn, bound_attn)
    bound_v = 1.0 / jnp.sqrt(1.0 * H)
    w_v = jax.random.uniform(k3, (1, H), jnp.float32, -bound_v, bound_v)
    hidden = jax.random.normal(k4, (B, H), jnp.float32)
    encoder_outputs = jax.random.normal(k5, (S, B, H), jnp.float32)
    return hidden, encoder_outputs, w_attn, b_attn, w_v


if __name__ == "__main__":
    # Small-shape check (module default HIDDEN_DIM=512 also works through the wrapper).
    B, S, H = 2, 8, 32
    hidden, enc, w_attn, b_attn, w_v = _make_inputs(jax.random.PRNGKey(0), B, S, H)
    out = jax.block_until_ready(bahdanau_attention(hidden, enc, w_attn, b_attn, w_v))
    ref = _reference(hidden, enc, w_attn, b_attn, w_v)
    assert out.shape == (B, S)
    assert jnp.allclose(out, ref, rtol=2e-2, atol=2e-2), "mismatch vs reference (small case)"
    assert jnp.allclose(jnp.sum(out, axis=1), 1.0, atol=1e-5)

    # Tiled / pipelined path: 2 batch tiles x 3 src tiles, ragged last src tile (masked).
    B2, S2, H2 = 16, 20, 128
    h2, e2, w2, b2, v2 = _make_inputs(jax.random.PRNGKey(1), B2, S2, H2)
    out2 = jax.block_until_ready(bahdanau_attention(h2, e2, w2, b2, v2, tb=8, ts=8))
    ref2 = _reference(h2, e2, w2, b2, v2)
    assert out2.shape == (B2, S2)
    assert jnp.allclose(out2, ref2, rtol=2e-2, atol=2e-2), "mismatch vs reference (tiled case)"
    assert jnp.allclose(jnp.sum(out2, axis=1), 1.0, atol=1e-5)

    print("KERNEL_OK")
</pallas_src>

<mosaic_0001>
module attributes {stable_mosaic.version = 11 : i64} {
  func.func @_attention_kernel(%arg0: i32, %arg1: i32, %arg2: memref<8x32xbf16, #tpu.memory_space<vmem>>, %arg3: memref<8x8x32xbf16, #tpu.memory_space<vmem>>, %arg4: memref<32x32xbf16, #tpu.memory_space<vmem>>, %arg5: memref<32x32xbf16, #tpu.memory_space<vmem>>, %arg6: memref<1x32xf32, #tpu.memory_space<vmem>>, %arg7: memref<1x32xf32, #tpu.memory_space<vmem>>, %arg8: memref<8x8xf32, #tpu.memory_space<vmem>>, %arg9: memref<1x8x8xf32, #tpu.memory_space<vmem>>, %arg10: memref<8x32xf32, #tpu.memory_space<vmem>>) attributes {dimension_semantics = [#tpu.dimension_semantics<parallel>, #tpu.dimension_semantics<arbitrary>], iteration_bounds = array<i64: 1, 1>, scalar_prefetch = 0 : i64, scratch_operands = 2 : i64, tpu.core_type = #tpu.core_type<tc>, window_params = [{transform_indices = @transform_0, window_bounds = array<i64: 8, 32>}, {transform_indices = @transform_1, window_bounds = array<i64: 8, 8, 32>}, {pipeline_mode = #tpu.pipeline_mode<synchronous>, transform_indices = @transform_2, window_bounds = array<i64: 32, 32>}, {pipeline_mode = #tpu.pipeline_mode<synchronous>, transform_indices = @transform_3, window_bounds = array<i64: 32, 32>}, {pipeline_mode = #tpu.pipeline_mode<synchronous>, transform_indices = @transform_4, window_bounds = array<i64: 1, 32>}, {pipeline_mode = #tpu.pipeline_mode<synchronous>, transform_indices = @transform_5, window_bounds = array<i64: 1, 32>}, {transform_indices = @transform_6, window_bounds = array<i64: 8, 8>}]} {
    %c0_i32 = arith.constant 0 : i32
    %0 = arith.cmpi eq, %arg1, %c0_i32 : i32
    %1 = arith.extui %0 : i1 to i32
    %c0_i32_0 = arith.constant 0 : i32
    %2 = arith.cmpi ne, %1, %c0_i32_0 : i32
    scf.if %2 {
      %c0_14 = arith.constant 0 : index
      %c0_15 = arith.constant 0 : index
      %25 = vector.load %arg2[%c0_14, %c0_15] : memref<8x32xbf16, #tpu.memory_space<vmem>>, vector<8x32xbf16>
      %c0_16 = arith.constant 0 : index
      %c0_17 = arith.constant 0 : index
      %26 = vector.load %arg4[%c0_16, %c0_17] : memref<32x32xbf16, #tpu.memory_space<vmem>>, vector<32x32xbf16>
      %cst_18 = arith.constant dense<0.000000e+00> : vector<8x32xf32>
      %27 = tpu.matmul %25, %26, %cst_18 {dimension_numbers = #tpu.dot_dimension_numbers<[1], [0], [0], [1], [0, 0, 1, 1], [], []>} : vector<8x32xbf16>, vector<32x32xbf16>, vector<8x32xf32> -> vector<8x32xf32>
      %c0_19 = arith.constant 0 : index
      %c0_20 = arith.constant 0 : index
      %28 = vector.load %arg6[%c0_19, %c0_20] : memref<1x32xf32, #tpu.memory_space<vmem>>, vector<1x32xf32>
      %29 = vector.broadcast %28 : vector<1x32xf32> to vector<8x32xf32>
      %30 = arith.addf %27, %29 : vector<8x32xf32>
      %c0_21 = arith.constant 0 : index
      %c0_22 = arith.constant 0 : index
      %31 = vector.load %arg10[%c0_21, %c0_22] : memref<8x32xf32, #tpu.memory_space<vmem>>, vector<8x32xf32>
      tpu.vector_store %arg10[%c0_21, %c0_22], %30 {strides = array<i32>} : memref<8x32xf32, #tpu.memory_space<vmem>>, vector<8x32xf32>,
    } else {
    }
    %c0 = arith.constant 0 : index
    %c0_1 = arith.constant 0 : index
    %c0_2 = arith.constant 0 : index
    %3 = vector.load %arg3[%c0, %c0_1, %c0_2] : memref<8x8x32xbf16, #tpu.memory_space<vmem>>, vector<8x8x32xbf16>
    %4 = vector.shape_cast %3 : vector<8x8x32xbf16> to vector<64x32xbf16>
    %c0_3 = arith.constant 0 : index
    %c0_4 = arith.constant 0 : index
    %5 = vector.load %arg5[%c0_3, %c0_4] : memref<32x32xbf16, #tpu.memory_space<vmem>>, vector<32x32xbf16>
    %cst = arith.constant dense<0.000000e+00> : vector<64x32xf32>
    %6 = tpu.matmul %4, %5, %cst {dimension_numbers = #tpu.dot_dimension_numbers<[1], [0], [0], [1], [0, 0, 1, 1], [], []>} : vector<64x32xbf16>, vector<32x32xbf16>, vector<64x32xf32> -> vector<64x32xf32>
    %7 = vector.shape_cast %6 : vector<64x32xf32> to vector<8x8x32xf32>
    %c0_5 = arith.constant 0 : index
    %c0_6 = arith.constant 0 : index
    %8 = vector.load %arg10[%c0_5, %c0_6] : memref<8x32xf32, #tpu.memory_space<vmem>>, vector<8x32xf32>
    %9 = vector.shape_cast %8 : vector<8x32xf32> to vector<1x8x32xf32>
    %10 = vector.broadcast %9 : vector<1x8x32xf32> to vector<8x8x32xf32>
    %11 = arith.addf %10, %7 : vector<8x8x32xf32>
    %12 = math.tanh %11 : vector<8x8x32xf32>
    %c0_7 = arith.constant 0 : index
    %c0_8 = arith.constant 0 : index
    %13 = vector.load %arg7[%c0_7, %c0_8] : memref<1x32xf32, #tpu.memory_space<vmem>>, vector<1x32xf32>
    %14 = vector.shape_cast %13 : vector<1x32xf32> to vector<1x1x32xf32>
    %15 = vector.broadcast %14 : vector<1x1x32xf32> to vector<8x8x32xf32>
    %16 = arith.mulf %12, %15 : vector<8x8x32xf32>
    %cst_9 = arith.constant dense<0.000000e+00> : vector<8x8xf32>
    %17 = vector.multi_reduction <add>, %16, %cst_9 [2] : vector<8x8x32xf32> to vector<8x8xf32>
    %18 = arith.index_cast %arg1 : i32 to index
    %c0_10 = arith.constant 0 : index
    %c0_11 = arith.constant 0 : index
    %19 = vector.load %arg9[%18, %c0_10, %c0_11] : memref<1x8x8xf32, #tpu.memory_space<vmem>>, vector<1x8x8xf32>
    %20 = vector.shape_cast %19 : vector<1x8x8xf32> to vector<8x8xf32>
    %21 = vector.shape_cast %17 : vector<8x8xf32> to vector<1x8x8xf32>
    tpu.vector_store %arg9[%18, %c0_10, %c0_11], %21 {strides = array<i32>} : memref<1x8x8xf32, #tpu.memory_space<vmem>>, vector<1x8x8xf32>,
    %c0_i32_12 = arith.constant 0 : i32
    %22 = arith.cmpi eq, %arg1, %c0_i32_12 : i32
    %23 = arith.extui %22 : i1 to i32
    %c0_i32_13 = arith.constant 0 : i32
    %24 = arith.cmpi ne, %23, %c0_i32_13 : i32
    scf.if %24 {
      %c0_14 = arith.constant 0 : index
      %c0_15 = arith.constant 0 : index
      %c0_16 = arith.constant 0 : index
      %25 = vector.load %arg9[%c0_14, %c0_15, %c0_16] : memref<1x8x8xf32, #tpu.memory_space<vmem>>, vector<1x8x8xf32>
      %26 = vector.shape_cast %25 : vector<1x8x8xf32> to vector<8x8xf32>
      %27 = tpu.transpose %26, [1, 0] : vector<8x8xf32> -> vector<8x8xf32>
      %cst_17 = arith.constant dense<0xFF800000> : vector<8xf32>
      %28 = vector.multi_reduction <maximumf>, %27, %cst_17 [1] : vector<8x8xf32> to vector<8xf32>
      %29 = vector.shape_cast %28 : vector<8xf32> to vector<8x1xf32>
      %30 = vector.broadcast %29 : vector<8x1xf32> to vector<8x8xf32>
      %31 = arith.subf %27, %30 : vector<8x8xf32>
      %32 = math.exp %31 : vector<8x8xf32>
      %cst_18 = arith.constant dense<0.000000e+00> : vector<8xf32>
      %33 = vector.multi_reduction <add>, %32, %cst_18 [1] : vector<8x8xf32> to vector<8xf32>
      %34 = vector.shape_cast %33 : vector<8xf32> to vector<8x1xf32>
      %35 = vector.broadcast %34 : vector<8x1xf32> to vector<8x8xf32>
      %36 = arith.divf %32, %35 : vector<8x8xf32>
      %c0_19 = arith.constant 0 : index
      %c0_20 = arith.constant 0 : index
      %37 = vector.load %arg8[%c0_19, %c0_20] : memref<8x8xf32, #tpu.memory_space<vmem>>, vector<8x8xf32>
      tpu.vector_store %arg8[%c0_19, %c0_20], %36 {strides = array<i32>} : memref<8x8xf32, #tpu.memory_space<vmem>>, vector<8x8xf32>,
    } else {
    }
    return
  }
  func.func @transform_0(%arg0: i32, %arg1: i32) -> (i32, i32) {
    %c0_i32 = arith.constant 0 : i32
    %c0_i32_0 = arith.constant 0 : i32
    return %arg0, %c0_i32 : i32, i32
  }
  func.func @transform_1(%arg0: i32, %arg1: i32) -> (i32, i32, i32) {
    %c0_i32 = arith.constant 0 : i32
    %c0_i32_0 = arith.constant 0 : i32
    return %arg1, %arg0, %c0_i32 : i32, i32, i32
  }
  func.func @transform_2(%arg0: i32, %arg1: i32) -> (i32, i32) {
    %c0_i32 = arith.constant 0 : i32
    %c0_i32_0 = arith.constant 0 : i32
    %c0_i32_1 = arith.constant 0 : i32
    return %c0_i32, %c0_i32_0 : i32, i32
  }
  func.func @transform_3(%arg0: i32, %arg1: i32) -> (i32, i32) {
    %c0_i32 = arith.constant 0 : i32
    %c0_i32_0 = arith.constant 0 : i32
    %c0_i32_1 = arith.constant 0 : i32
    return %c0_i32, %c0_i32_0 : i32, i32
  }
  func.func @transform_4(%arg0: i32, %arg1: i32) -> (i32, i32) {
    %c0_i32 = arith.constant 0 : i32
    %c0_i32_0 = arith.constant 0 : i32
    %c0_i32_1 = arith.constant 0 : i32
    return %c0_i32, %c0_i32_0 : i32, i32
  }
  func.func @transform_5(%arg0: i32, %arg1: i32) -> (i32, i32) {
    %c0_i32 = arith.constant 0 : i32
    %c0_i32_0 = arith.constant 0 : i32
    %c0_i32_1 = arith.constant 0 : i32
    return %c0_i32, %c0_i32_0 : i32, i32
  }
  func.func @transform_6(%arg0: i32, %arg1: i32) -> (i32, i32) {
    %c0_i32 = arith.constant 0 : i32
    %c0_i32_0 = arith.constant 0 : i32
    return %arg0, %c0_i32 : i32, i32
  }
}

</mosaic_0001>

<llo_original>
// kernel: tpu_custom_call.1
$region0: #{tpu_custom_call.1}
  #allocation0 [shape = 'u32[]', space=smem, size = 0x4, offset = 0x4, fixed_abs, tag = 'smem constant byte address 0x4 - core index']
  #allocation1 [shape = 'u32[144,128]{1,0:T(1,128)}', space=vmem, size = 0x12000, scoped, tag = 'internal scratch']
  #allocation2 [shape = 'f32[1,8,8]{2,1,0:T(8,128)}', space=vmem, size = 0x1000, scoped, tag = 'scratch operand']
  #allocation3 [shape = 'f32[8,32]{1,0:T(8,128)}', space=vmem, size = 0x1000, scoped, tag = 'scratch operand']
  %s0 = inlined_call_operand.hbm [shape: bf16[8,32], index: 0, kind: input, shape index: {}]
  %s1 = inlined_call_operand.hbm [shape: bf16[8,8,32], index: 1, kind: input, shape index: {}]
  %s2 = inlined_call_operand.hbm [shape: bf16[32,32], index: 2, kind: input, shape index: {}]
  %s3 = inlined_call_operand.hbm [shape: bf16[32,32], index: 3, kind: input, shape index: {}]
  %s4 = inlined_call_operand.vmem [shape: f32[1,32], index: 4, kind: input, shape index: {}]
  %s5 = inlined_call_operand.vmem [shape: f32[1,32], index: 5, kind: input, shape index: {}]
  %s6 = inlined_call_operand.hbm [shape: f32[8,8], index: 6, kind: output, shape index: {}]
  %s7 = sld [smem:[#allocation0]]
  $region58: #{tpu_custom_call.1} parent=0
    _
  %s9 = ssub.s32 1, %s7
  %s10 = scalar_select 0, %s9, %s7
  $region1: #{tpu_custom_call.1} parent=0
    #allocation4 [shape = 'u8[2048]{0}', space=vmem, size = 0x800, scoped, tag = 'input window, operand 0, single buffered']
    #allocation5 [shape = 's32[1]{0}', space=sflag, size = 0x4, scoped, tag = 'scoped memory for tpu_custom_call.1']
    #allocation6 [shape = 's32[1]{0}', space=sflag, size = 0x4, scoped, tag = 'scoped memory for tpu_custom_call.1']
    #allocation7 [shape = 'u8[16384]{0}', space=vmem, size = 0x4000, scoped, tag = 'input window, operand 1, single buffered']
    #allocation8 [shape = 's32[1]{0}', space=sflag, size = 0x4, scoped, tag = 'scoped memory for tpu_custom_call.1']
    #allocation9 [shape = 'u8[8192]{0}', space=vmem, size = 0x2000, scoped, tag = 'input window, operand 2, single buffered']
    #allocation10 [shape = 'u8[8192]{0}', space=vmem, size = 0x2000, scoped, tag = 'input window, operand 3, single buffered']
    #allocation11 [shape = 's32[1]{0}', space=sflag, size = 0x4, scoped, tag = 'scoped memory for tpu_custom_call.1']
    #allocation12 [shape = 'u8[4096]{0}', space=vmem, size = 0x1000, scoped, tag = 'output window, operand 0, single buffered']
    %11 = vsyncpa [#allocation5], 0
    %12 = vsyncpa [#allocation8], 0
    %13 = vsyncpa [#allocation11], 0
    %14 = vsyncpa [#allocation6], 0
    // Predicated region
    $region2: #{tpu_custom_call.1} parent=1 // pred_check
      _
    $region3: #{tpu_custom_call.1} parent=1 // pred_check_branch
      %16 = sbr.rel (0) target = $region5
    $region4: #{tpu_custom_call.1} parent=1 // pred_region
      %s18 = ssub.s32 64, 64
      %19 = vsyncadd [#allocation5], %s18
      %s21 = sshll.u32 [#allocation4], 4
      %s22 = int_to_ptr.vmem [resolvable:$true] %s21
      %24 = dma.hbm_to_vmem [thread:$0]  %s0, 64, %s22, [#allocation5]
    $region5: #{tpu_custom_call.1} parent=1 // pred_fallthru
      _
    // Predicated region
    $region6: #{tpu_custom_call.1} parent=1 // pred_check
      _
    $region7: #{tpu_custom_call.1} parent=1 // pred_check_branch
      %26 = sbr.rel (0) target = $region9
    $region8: #{tpu_custom_call.1} parent=1 // pred_region
      %s28 = ssub.s32 512, 512
      %29 = vsyncadd [#allocation8], %s28
      %s30 = sshll.u32 [#allocation7], 4
      %s31 = int_to_ptr.vmem [resolvable:$true] %s30
      %36 = dma.hbm_to_vmem [thread:$0]  %s1, 512, %s31, [#allocation8], 64, 64, 4
    $region9: #{tpu_custom_call.1} parent=1 // pred_fallthru
      _
    // Predicated region
    $region10: #{tpu_custom_call.1} parent=1 // pred_check
      _
    $region11: #{tpu_custom_call.1} parent=1 // pred_check_branch
      %38 = sbr.rel (0) target = $region13
    $region12: #{tpu_custom_call.1} parent=1 // pred_region
      %s40 = ssub.s32 256, 256
      %41 = vsyncadd [#allocation8], %s40
      %s42 = sshll.u32 [#allocation9], 4
      %s43 = int_to_ptr.vmem [resolvable:$true] %s42
      %48 = dma.hbm_to_vmem [thread:$0]  %s2, 256, %s43, [#allocation8], 64, 64, 4
    $region13: #{tpu_custom_call.1} parent=1 // pred_fallthru
      _
    // Predicated region
    $region14: #{tpu_custom_call.1} parent=1 // pred_check
      _
    $region15: #{tpu_custom_call.1} parent=1 // pred_check_branch
      %50 = sbr.rel (0) target = $region17
    $region16: #{tpu_custom_call.1} parent=1 // pred_region
      %s52 = ssub.s32 256, 256
      %53 = vsyncadd [#allocation11], %s52
      %s54 = sshll.u32 [#allocation10], 4
      %s55 = int_to_ptr.vmem [resolvable:$true] %s54
      %60 = dma.hbm_to_vmem [thread:$0]  %s3, 256, %s55, [#allocation11], 64, 64, 4
    $region17: #{tpu_custom_call.1} parent=1 // pred_fallthru
      _
    // Predicated region
    $region18: #{tpu_custom_call.1} parent=1 // pred_check
      _
    $region19: #{tpu_custom_call.1} parent=1 // pred_check_branch
      %62 = sbr.rel (0) target = $region21
    $region20: #{tpu_custom_call.1} parent=1 // pred_region
      _
    $region21: #{tpu_custom_call.1} parent=1 // pred_fallthru
      _
    // Predicated region
    $region22: #{tpu_custom_call.1} parent=1 // pred_check
      _
    $region23: #{tpu_custom_call.1} parent=1 // pred_check_branch
      %64 = sbr.rel (0) target = $region25
    $region24: #{tpu_custom_call.1} parent=1 // pred_region
      _
    $region25: #{tpu_custom_call.1} parent=1 // pred_fallthru
      _
    // Predicated region
    $region26: #{tpu_custom_call.1} parent=1 // pred_check
      _
    $region27: #{tpu_custom_call.1} parent=1 // pred_check_branch
      %66 = sbr.rel (0) target = $region29
    $region28: #{tpu_custom_call.1} parent=1 // pred_region
      %67 = dma.done [#allocation5], 64
    $region29: #{tpu_custom_call.1} parent=1 // pred_fallthru
      _
    // Predicated region
    $region30: #{tpu_custom_call.1} parent=1 // pred_check
      _
    $region31: #{tpu_custom_call.1} parent=1 // pred_check_branch
      %69 = sbr.rel (0) target = $region33
    $region32: #{tpu_custom_call.1} parent=1 // pred_region
      %70 = dma.done [#allocation8], 512
    $region33: #{tpu_custom_call.1} parent=1 // pred_fallthru
      _
    // Predicated region
    $region34: #{tpu_custom_call.1} parent=1 // pred_check
      _
    $region35: #{tpu_custom_call.1} parent=1 // pred_check_branch
      %72 = sbr.rel (0) target = $region37
    $region36: #{tpu_custom_call.1} parent=1 // pred_region
      %73 = dma.done [#allocation8], 256
    $region37: #{tpu_custom_call.1} parent=1 // pred_fallthru
      _
    // Predicated region
    $region38: #{tpu_custom_call.1} parent=1 // pred_check
      _
    $region39: #{tpu_custom_call.1} parent=1 // pred_check_branch
      %75 = sbr.rel (0) target = $region41
    $region40: #{tpu_custom_call.1} parent=1 // pred_region
      %76 = dma.done [#allocation11], 256
    $region41: #{tpu_custom_call.1} parent=1 // pred_fallthru
      _
    %p78 = scmp.eq.s32.totalorder 0, 0
    // Predicated region
    $region42: #{tpu_custom_call.1} parent=1 // pred_check
      %p79 = pneg %p78
    $region43: #{tpu_custom_call.1} parent=1 // pred_check_branch
      %81 = sbr.rel (%p79) target = $region45
    $region44: #{tpu_custom_call.1} parent=1 // pred_region
      %v82 = vld [vmem:[#allocation4] sm:$0xf]
      %v83 = vld [vmem:[#allocation9] sm:$0xf]
      %v84 = vld [vmem:[#allocation9 + $0x4] sm:$0xf]
      %v85 = vld [vmem:[#allocation9 + $0x8] sm:$0xf]
      %v86 = vld [vmem:[#allocation9 + $0xc] sm:$0xf]
      %v87 = vld [vmem:[%s4] sm:$0x1]
      %v89 = vlaneseq
      %v90 = vshrl.u32 %v89, 7
      %v91 = vsub.s32 0, %v90
      %v92 = vrot.slane %v87, %v91
      %v98 = vunpack.c.l.b16 %v83
      %v99 = vunpack.c.l.b16 %v84
      %v100 = vunpack.c.l.b16 %v85
      %v101 = vunpack.c.l.b16 %v86
      %v102 = vpack.c.b16 %v99, %v98
      %v103 = vpack.c.b16 %v101, %v100
      %vm106 = vcmask 261120
      %v108 = vsel %vm106, %v82, 0
      %110 = vmatprep.subr.bf16.mxu0 0
      %111 = vmatpush1.bf16.msra.mxu0 %v102
      %112 = vmatprep.subr.bf16.mxu0 0
      %113 = vmatpush1.bf16.msra.mxu0 %v103
      %114 = vmatprep.subr.bf16.mxu0 0
      %115 = vmatpush1.bf16.msra.mxu0 0
      %116 = vmatprep.subr.bf16.mxu0 0
      %117 = vmatpush1.bf16.msra.mxu0 0
      %118 = vmatprep.subr.bf16.mxu0 0
      %119 = vmatpush1.bf16.msra.mxu0 0
      %120 = vmatprep.subr.bf16.mxu0 0
      %121 = vmatpush1.bf16.msra.mxu0 0
      %122 = vmatprep.subr.bf16.mxu0 0
      %123 = vmatpush1.bf16.msra.mxu0 0
      %124 = vmatprep.subr.bf16.mxu0 0
      %125 = vmatpush1.bf16.msra.mxu0 0
      %126 = vmatprep.subr.bf16.mxu0 0
      %127 = vmatpush1.bf16.msra.mxu0 0
      %128 = vmatprep.subr.bf16.mxu0 0
      %129 = vmatpush1.bf16.msra.mxu0 0
      %130 = vmatprep.subr.bf16.mxu0 0
      %131 = vmatpush1.bf16.msra.mxu0 0
      %132 = vmatprep.subr.bf16.mxu0 0
      %133 = vmatpush1.bf16.msra.mxu0 0
      %134 = vmatprep.subr.bf16.mxu0 0
      %135 = vmatpush1.bf16.msra.mxu0 0
      %136 = vmatprep.subr.bf16.mxu0 0
      %137 = vmatpush1.bf16.msra.mxu0 0
      %138 = vmatprep.subr.bf16.mxu0 0
      %139 = vmatpush1.bf16.msra.mxu0 0
      %140 = vmatprep.subr.bf16.mxu0 0
      %141 = vmatpush1.bf16.msra.mxu0 0
      %142 = vmatprep.mubr.bf16.mxu0 0
      %143 = vmatmul.mubr.bf16.gmra.mrb[0].mxu0 %v108
      %v144 = vpop.f32.mrb[0].mxu0
      %v145 = vadd.f32 %v92, %v144
      %v146 = vpop.f32.mrb[0].mxu0
      %v147 = vpop.f32.mrb[0].mxu0
      %v148 = vpop.f32.mrb[0].mxu0
      %149 = vdwg.mxu0
      %150 = vst.msk [vmem:[#allocation3] sm:$0xff] %vm106, %v145
    $region45: #{tpu_custom_call.1} parent=1 // pred_fallthru
      _
    %v151 = vld [vmem:[#allocation7] sm:$0xf]
    %v152 = vld [vmem:[#allocation7 + $0x4] sm:$0xf]
    %v153 = vld [vmem:[#allocation7 + $0x8] sm:$0xf]
    %v154 = vld [vmem:[#allocation7 + $0xc] sm:$0xf]
    %v155 = vld [vmem:[#allocation7 + $0x10] sm:$0xf]
    %v156 = vld [vmem:[#allocation7 + $0x14] sm:$0xf]
    %v157 = vld [vmem:[#allocation7 + $0x18] sm:$0xf]
    %v158 = vld [vmem:[#allocation7 + $0x1c] sm:$0xf]
    %v159 = vld [vmem:[#allocation10] sm:$0xf]
    %v160 = vld [vmem:[#allocation10 + $0x4] sm:$0xf]
    %v161 = vld [vmem:[#allocation10 + $0x8] sm:$0xf]
    %v162 = vld [vmem:[#allocation10 + $0xc] sm:$0xf]
    %v171 = vunpack.c.l.b16 %v151
    %v172 = vunpack.c.l.b16 %v152
    %v173 = vunpack.c.l.b16 %v153
    %v174 = vunpack.c.l.b16 %v154
    %v175 = vunpack.c.l.b16 %v155
    %v176 = vunpack.c.l.b16 %v156
    %v177 = vunpack.c.l.b16 %v157
    %v178 = vunpack.c.l.b16 %v158
    %v179 = vpack.c.b16 %v172, %v171
    %v180 = vpack.c.b16 %v174, %v173
    %v181 = vpack.c.b16 %v176, %v175
    %v182 = vpack.c.b16 %v178, %v177
    %v187 = vunpack.c.l.b16 %v159
    %v188 = vunpack.c.l.b16 %v160
    %v189 = vunpack.c.l.b16 %v161
    %v190 = vunpack.c.l.b16 %v162
    %v191 = vpack.c.b16 %v188, %v187
    %v192 = vpack.c.b16 %v190, %v189
    %vm195 = vcmask 261120
    %v197 = vsel %vm195, %v179, 0
    %v200 = vsel %vm195, %v180, 0
    %v203 = vsel %vm195, %v181, 0
    %v206 = vsel %vm195, %v182, 0
    %208 = vmatprep.subr.bf16.mxu0 0
    %209 = vmatpush1.bf16.msra.mxu0 %v191
    %210 = vmatprep.subr.bf16.mxu0 0
    %211 = vmatpush1.bf16.msra.mxu0 %v192
    %212 = vmatprep.subr.bf16.mxu0 0
    %213 = vmatpush1.bf16.msra.mxu0 0
    %214 = vmatprep.subr.bf16.mxu0 0
    %215 = vmatpush1.bf16.msra.mxu0 0
    %216 = vmatprep.subr.bf16.mxu0 0
    %217 = vmatpush1.bf16.msra.mxu0 0
    %218 = vmatprep.subr.bf16.mxu0 0
    %219 = vmatpush1.bf16.msra.mxu0 0
    %220 = vmatprep.subr.bf16.mxu0 0
    %221 = vmatpush1.bf16.msra.mxu0 0
    %222 = vmatprep.subr.bf16.mxu0 0
    %223 = vmatpush1.bf16.msra.mxu0 0
    %224 = vmatprep.subr.bf16.mxu0 0
    %225 = vmatpush1.bf16.msra.mxu0 0
    %226 = vmatprep.subr.bf16.mxu0 0
    %227 = vmatpush1.bf16.msra.mxu0 0
    %228 = vmatprep.subr.bf16.mxu0 0
    %229 = vmatpush1.bf16.msra.mxu0 0
    %230 = vmatprep.subr.bf16.mxu0 0
    %231 = vmatpush1.bf16.msra.mxu0 0
    %232 = vmatprep.subr.bf16.mxu0 0
    %233 = vmatpush1.bf16.msra.mxu0 0
    %234 = vmatprep.subr.bf16.mxu0 0
    %235 = vmatpush1.bf16.msra.mxu0 0
    %236 = vmatprep.subr.bf16.mxu0 0
    %237 = vmatpush1.bf16.msra.mxu0 0
    %238 = vmatprep.subr.bf16.mxu0 0
    %239 = vmatpush1.bf16.msra.mxu0 0
    %240 = vmatprep.mubr.bf16.mxu0 0
    %241 = vmatmul.mubr.bf16.gmra.mrb[0].mxu0 %v197
    %v242 = vpop.f32.mrb[0].mxu0
    %v243 = vadd.f32 0.0, %v242
    %v244 = vpop.f32.mrb[0].mxu0
    %v245 = vpop.f32.mrb[0].mxu0
    %v246 = vadd.f32 0.0, %v245
    %v247 = vpop.f32.mrb[0].mxu0
    %248 = vmatprep.mubr.bf16.mxu0 0
    %249 = vmatmul.mubr.bf16.gmra.mrb[0].mxu0 %v200
    %v250 = vpop.f32.mrb[0].mxu0
    %v251 = vadd.f32 0.0, %v250
    %v252 = vpop.f32.mrb[0].mxu0
    %v253 = vpop.f32.mrb[0].mxu0
    %v254 = vadd.f32 0.0, %v253
    %v255 = vpop.f32.mrb[0].mxu0
    %256 = vmatprep.mubr.bf16.mxu0 0
    %257 = vmatmul.mubr.bf16.gmra.mrb[0].mxu0 %v203
    %v258 = vpop.f32.mrb[0].mxu0
    %v259 = vadd.f32 0.0, %v258
    %v260 = vpop.f32.mrb[0].mxu0
    %v261 = vpop.f32.mrb[0].mxu0
    %v262 = vadd.f32 0.0, %v261
    %v263 = vpop.f32.mrb[0].mxu0
    %264 = vmatprep.mubr.bf16.mxu0 0
    %265 = vmatmul.mubr.bf16.gmra.mrb[0].mxu0 %v206
    %v266 = vpop.f32.mrb[0].mxu0
    %v267 = vadd.f32 0.0, %v266
    %v268 = vpop.f32.mrb[0].mxu0
    %v269 = vpop.f32.mrb[0].mxu0
    %v270 = vadd.f32 0.0, %v269
    %v271 = vpop.f32.mrb[0].mxu0
    %272 = vdwg.mxu0
    %v273 = vld [vmem:[#allocation3] sm:$0xff]
    %v274 = vadd.f32 %v273, %v243
    %v275 = vadd.f32 %v273, %v246
    %v276 = vadd.f32 %v273, %v251
    %v277 = vadd.f32 %v273, %v254
    %v278 = vadd.f32 %v273, %v259
    %v279 = vadd.f32 %v273, %v262
    %v280 = vadd.f32 %v273, %v267
    %v281 = vadd.f32 %v273, %v270
    %v282 = vtanh.pop %v274
    %v283 = vtanh.pop %v275
    %v284 = vtanh.pop %v276
    %v285 = vtanh.pop %v277
    %v286 = vtanh.pop %v278
    %v287 = vtanh.pop %v279
    %v288 = vtanh.pop %v280
    %v289 = vtanh.pop %v281
    %v290 = vld [vmem:[%s5] sm:$0x1]
    %v292 = vlaneseq
    %v293 = vshrl.u32 %v292, 7
    %v294 = vsub.s32 0, %v293
    %v295 = vrot.slane %v290, %v294
    %v297 = vmul.f32 %v282, %v295
    %v298 = vmul.f32 %v283, %v295
    %v299 = vmul.f32 %v284, %v295
    %v300 = vmul.f32 %v285, %v295
    %v301 = vmul.f32 %v286, %v295
    %v302 = vmul.f32 %v287, %v295
    %v303 = vmul.f32 %v288, %v295
    %v304 = vmul.f32 %v289, %v295
    %v305 = vsel %vm195, %v297, 0.0
    %306 = vadd.xlane.f32.xlu0 %v305
    %v307 = vpop.xlane.xlu0 %306
    %v308 = vsel %vm195, %v298, 0.0
    %309 = vadd.xlane.f32.xlu0 %v308
    %v310 = vpop.xlane.xlu0 %309
    %v311 = vsel %vm195, %v299, 0.0
    %312 = vadd.xlane.f32.xlu0 %v311
    %v313 = vpop.xlane.xlu0 %312
    %v314 = vsel %vm195, %v300, 0.0
    %315 = vadd.xlane.f32.xlu0 %v314
    %v316 = vpop.xlane.xlu0 %315
    %v317 = vsel %vm195, %v301, 0.0
    %318 = vadd.xlane.f32.xlu0 %v317
    %v319 = vpop.xlane.xlu0 %318
    %v320 = vsel %vm195, %v302, 0.0
    %321 = vadd.xlane.f32.xlu0 %v320
    %v322 = vpop.xlane.xlu0 %321
    %v323 = vsel %vm195, %v303, 0.0
    %324 = vadd.xlane.f32.xlu0 %v323
    %v325 = vpop.xlane.xlu0 %324
    %v326 = vsel %vm195, %v304, 0.0
    %327 = vadd.xlane.f32.xlu0 %v326
    %v328 = vpop.xlane.xlu0 %327
    %v337 = vlaneseq
    %v338 = vand.u32 %v337, 127
    %v339 = vlaneseq
    %v340 = vshrl.u32 %v339, 7
    %v341 = vsub.s32 %v338, %v340
    %v342 = vrot.slane %v307, %v341
    %v343 = vlaneseq
    %v344 = vshrl.u32 %v343, 7
    %v345 = vsub.s32 %v338, %v344
    %v346 = vrot.slane %v310, %v345
    %v347 = vlaneseq
    %v348 = vshrl.u32 %v347, 7
    %v349 = vsub.s32 %v338, %v348
    %v350 = vrot.slane %v313, %v349
    %v351 = vlaneseq
    %v352 = vshrl.u32 %v351, 7
    %v353 = vsub.s32 %v338, %v352
    %v354 = vrot.slane %v316, %v353
    %v355 = vlaneseq
    %v356 = vshrl.u32 %v355, 7
    %v357 = vsub.s32 %v338, %v356
    %v358 = vrot.slane %v319, %v357
    %v359 = vlaneseq
    %v360 = vshrl.u32 %v359, 7
    %v361 = vsub.s32 %v338, %v360
    %v362 = vrot.slane %v322, %v361
    %v363 = vlaneseq
    %v364 = vshrl.u32 %v363, 7
    %v365 = vsub.s32 %v338, %v364
    %v366 = vrot.slane %v325, %v365
    %v367 = vlaneseq
    %v368 = vshrl.u32 %v367, 7
    %v369 = vsub.s32 %v338, %v368
    %v370 = vrot.slane %v328, %v369
    %vm371 = vcmask 1041409
    %v372 = vsel %vm371, %v346, %v342
    %vm373 = vcmask 1042434
    %v374 = vsel %vm373, %v350, %v372
    %vm375 = vcmask 1043459
    %v376 = vsel %vm375, %v354, %v374
    %vm377 = vcmask 1044484
    %v378 = vsel %vm377, %v358, %v376
    %vm379 = vcmask 1045509
    %v380 = vsel %vm379, %v362, %v378
    %vm381 = vcmask 1046534
    %v382 = vsel %vm381, %v366, %v380
    %vm383 = vcmask 1047559
    %v384 = vsel %vm383, %v370, %v382
    %s386 = smul.u32 0, 8
    %s387 = scalar_lea.vmem [#allocation2], %s386
    %vm388 = vcmask 64512
    %389 = vst.msk [vmem:[%s387] sm:$0xff] %vm388, %v384
    // Predicated region
    $region46: #{tpu_custom_call.1} parent=1 // pred_check
      %p390 = pneg %p78
    $region47: #{tpu_custom_call.1} parent=1 // pred_check_branch
      %392 = sbr.rel (%p390) target = $region49
    $region48: #{tpu_custom_call.1} parent=1 // pred_region
      %v393 = vld [vmem:[#allocation2] sm:$0xff]
      %394 = vxpose.xlu0.b32.start [1/16] %v393, 128
      %395 = vxpose.xlu0.b32.cont [2/16] 0.0, 128
      %396 = vxpose.xlu0.b32.cont [3/16] 0.0, 128
      %397 = vxpose.xlu0.b32.cont [4/16] 0.0, 128
      %398 = vxpose.xlu0.b32.cont [5/16] 0.0, 128
      %399 = vxpose.xlu0.b32.cont [6/16] 0.0, 128
      %400 = vxpose.xlu0.b32.cont [7/16] 0.0, 128
      %401 = vxpose.xlu0.b32.cont [8/16] 0.0, 128
      %402 = vxpose.xlu0.b32.cont [9/16] 0.0, 128
      %403 = vxpose.xlu0.b32.cont [10/16] 0.0, 128
      %404 = vxpose.xlu0.b32.cont [11/16] 0.0, 128
      %405 = vxpose.xlu0.b32.cont [12/16] 0.0, 128
      %406 = vxpose.xlu0.b32.cont [13/16] 0.0, 128
      %407 = vxpose.xlu0.b32.cont [14/16] 0.0, 128
      %408 = vxpose.xlu0.b32.cont [15/16] 0.0, 128
      %409 = vxpose.xlu0.b32.end [16/16] 0.0, 128
      %v410 = vpop.trf.xlu0
      %v411 = vpop.trf.xlu0
      %v412 = vpop.trf.xlu0
      %v413 = vpop.trf.xlu0
      %v414 = vpop.trf.xlu0
      %v415 = vpop.trf.xlu0
      %v416 = vpop.trf.xlu0
      %v417 = vpop.trf.xlu0
      %v418 = vpop.trf.xlu0
      %v419 = vpop.trf.xlu0
      %v420 = vpop.trf.xlu0
      %v421 = vpop.trf.xlu0
      %v422 = vpop.trf.xlu0
      %v423 = vpop.trf.xlu0
      %v424 = vpop.trf.xlu0
      %v425 = vpop.trf.xlu0
      %v426 = vsel %vm388, %v410, -inf
      %427 = vmax.xlane.f32.xlu0 %v426
      %v428 = vpop.xlane.xlu0 %427
      %v429 = vsub.f32 %v410, %v428
      %v430 = vmul.f32 %v429, 1.442695
      %v431 = vpow.pop %v430
      %v432 = vsel %vm388, %v431, 0.0
      %433 = vadd.xlane.f32.xlu0 %v432
      %v434 = vpop.xlane.xlu0 %433
      %v435 = vrcp.pop %v434
      %v436 = vmul.f32 %v431, %v435
      %437 = vst.msk [vmem:[#allocation12] sm:$0xff] %vm388, %v436
    $region49: #{tpu_custom_call.1} parent=1 // pred_fallthru
      _
    // Predicated region
    $region50: #{tpu_custom_call.1} parent=1 // pred_check
      _
    $region51: #{tpu_custom_call.1} parent=1 // pred_check_branch
      %439 = sbr.rel (0) target = $region53
    $region52: #{tpu_custom_call.1} parent=1 // pred_region
      %s441 = ssub.s32 128, 128
      %442 = vsyncadd [#allocation6], %s441
      %s444 = sshll.u32 [#allocation12], 4
      %s445 = int_to_ptr.vmem [resolvable:$true] %s444
      %447 = dma.vmem_to_hbm [thread:$0]  %s445, 128, %s6, [#allocation6]
    $region53: #{tpu_custom_call.1} parent=1 // pred_fallthru
      _
    // Predicated region
    $region54: #{tpu_custom_call.1} parent=1 // pred_check
      _
    $region55: #{tpu_custom_call.1} parent=1 // pred_check_branch
      %449 = sbr.rel (0) target = $region57
    $region56: #{tpu_custom_call.1} parent=1 // pred_region
      %450 = dma.done [#allocation6], 128
    $region57: #{tpu_custom_call.1} parent=1 // pred_fallthru
      _
    %451 = vsyncpa [#allocation5], 1
    %452 = vsyncpa [#allocation8], 1
    %453 = vsyncpa [#allocation11], 1
    %454 = vsyncpa [#allocation6], 1

</llo_original>
